<compile_context>
chip_gen: v5e
topology: v5e:2x2
jax: 0.10.0
libtpu: 0.0.40
codegen_flags: <defaults>
</compile_context>

<pallas_src>
import jax
import jax.numpy as jnp
from jax.experimental import pallas as pl
from jax.experimental.pallas import tpu as pltpu

# Params at or above this byte count take the tiled Pallas path by default.
_PALLAS_BYTES_THRESHOLD = 1 << 20  # 1 MiB


# ---------------------------------------------------------------------------
# Kernel bodies
# ---------------------------------------------------------------------------

def _dma_clone_kernel(src_ref, dst_ref, sem):
    # Direct HBM->HBM copy: one read + one write, no VMEM staging pass.
    cp = pltpu.make_async_copy(src_ref, dst_ref, sem)
    cp.start()
    cp.wait()


def _copy_block_kernel(src_ref, dst_ref):
    # Lane/sublane-dense VMEM tile copy; Pallas double-buffers the DMAs.
    dst_ref[...] = src_ref[...]


# ---------------------------------------------------------------------------
# Pallas wrappers
# ---------------------------------------------------------------------------

@jax.jit
def _dma_clone(param: jax.Array) -> jax.Array:
    """Grid-less HBM->HBM DMA clone (guaranteed distinct buffer)."""
    nbytes = param.size * param.dtype.itemsize
    return pl.pallas_call(
        _dma_clone_kernel,
        out_shape=jax.ShapeDtypeStruct(param.shape, param.dtype),
        in_specs=[pl.BlockSpec(memory_space=pl.ANY)],
        out_specs=pl.BlockSpec(memory_space=pl.ANY),
        scratch_shapes=[pltpu.SemaphoreType.DMA(())],
        cost_estimate=pl.CostEstimate(
            flops=0, transcendentals=0, bytes_accessed=2 * nbytes),
    )(param)


@jax.jit
def _tiled_clone_2d(x: jax.Array) -> jax.Array:
    """Tiled copy of a lane-dense 2-D slab (C a multiple of 128)."""
    R, C = x.shape
    br = min(512, R)   # full-dim if R < 512 (exempt from the 8-divisibility rule)
    bc = min(512, C)   # C chosen from {512, 256, 128} by the caller
    grid = (pl.cdiv(R, br), pl.cdiv(C, bc))
    nbytes = x.size * x.dtype.itemsize
    return pl.pallas_call(
        _copy_block_kernel,
        out_shape=jax.ShapeDtypeStruct((R, C), x.dtype),
        grid=grid,
        in_specs=[pl.BlockSpec((br, bc), lambda i, j: (i, j))],
        out_specs=pl.BlockSpec((br, bc), lambda i, j: (i, j)),
        compiler_params=pltpu.CompilerParams(
            dimension_semantics=("parallel", "parallel")),
        cost_estimate=pl.CostEstimate(
            flops=0, transcendentals=0, bytes_accessed=2 * nbytes),
    )(x)


def _pick_slab_shape(n: int):
    """Lane-dense (R, C) reshape for a flat size-n array, or None."""
    for c in (512, 256, 128):
        if n % c == 0:
            return (n // c, c)
    return None


# ---------------------------------------------------------------------------
# Forward
# ---------------------------------------------------------------------------

def tactile_weight_model_forward(param: jax.Array,
                                 *, use_pallas: bool | None = None) -> jax.Array:
    """Pallas implementation of TactileWeightModel.forward() (param.clone()).

    Args:
      param: (1, dim) float32 parameter array.
      use_pallas: None (default) -> size-based dispatch (Pallas only for params
        >= 1 MiB); True forces a Pallas kernel; False forces plain jnp.copy.
    Returns:
      A copy of `param` with the same shape/dtype/values.
    """
    nbytes = param.size * param.dtype.itemsize
    if use_pallas is None:
        use_pallas = nbytes >= _PALLAS_BYTES_THRESHOLD

    if not use_pallas:
        # Clone for immutable JAX arrays; effectively free.
        return jnp.copy(param)

    slab = _pick_slab_shape(param.size)
    if slab is None:
        # Not lane-divisible: single direct HBM->HBM DMA, no VMEM staging.
        return _dma_clone(param)

    # Lane/sublane-dense tiled copy (double-buffered, megacore-parallel).
    out2d = _tiled_clone_2d(param.reshape(slab))
    return out2d.reshape(param.shape)


class TactileWeightModelPallas:
    """Mirror of the PyTorch module: holds `param` of shape (1, dim)."""

    def __init__(self, dim: int = 3, wt_init: jax.Array | None = None,
                 key: jax.Array | None = None):
        if wt_init is not None:
            self.param = jnp.asarray(wt_init, dtype=jnp.float32)
        else:
            if key is None:
                key = jax.random.PRNGKey(0)
            # torch.rand -> uniform [0, 1)
            self.param = jax.random.uniform(
                key, (1, dim), dtype=jnp.float32, minval=0.0, maxval=1.0)

    def __call__(self) -> jax.Array:
        # Default dispatch: tiny params skip the kernel entirely.
        return tactile_weight_model_forward(self.param)


if __name__ == "__main__":
    key = jax.random.PRNGKey(0)

    # 1) Module-consistent small shape (dim=3): default path (no kernel launch).
    dim = 3
    model = TactileWeightModelPallas(dim=dim, key=key)
    out = jax.block_until_ready(model())
    assert out.shape == (1, dim), out.shape
    assert out.dtype == jnp.float32, out.dtype
    assert bool(jnp.allclose(out, model.param)), "default clone mismatch"

    # 2) Forced Pallas path on the tiny param: single HBM->HBM DMA clone.
    out_dma = jax.block_until_ready(
        tactile_weight_model_forward(model.param, use_pallas=True))
    assert out_dma.shape == (1, dim), out_dma.shape
    assert bool(jnp.allclose(out_dma, model.param)), "DMA clone mismatch"

    # 3) Scaled-dim path: lane-dense tiled copy (2 MiB -> slab (1024, 512)).
    big_dim = 1024 * 512
    big_model = TactileWeightModelPallas(dim=big_dim, key=jax.random.PRNGKey(1))
    out_big = jax.block_until_ready(big_model())
    assert out_big.shape == (1, big_dim), out_big.shape
    assert bool(jnp.allclose(out_big, big_model.param)), "tiled clone mismatch"

    print("KERNEL_OK")
</pallas_src>

<mosaic_0001>
module attributes {stable_mosaic.version = 11 : i64} {
  func.func @_dma_clone_kernel(%arg0: memref<1x3xf32, #tpu.memory_space<any>>, %arg1: memref<1x3xf32, #tpu.memory_space<any>>, %arg2: memref<!tpu.dma_semaphore, #tpu.memory_space<semaphore_mem>>) attributes {dimension_semantics = [], scalar_prefetch = 0 : i64, scratch_operands = 1 : i64, tpu.core_type = #tpu.core_type<tc>} {
    tpu.enqueue_dma source(%arg0 : memref<1x3xf32, #tpu.memory_space<any>>) target(%arg1 : memref<1x3xf32, #tpu.memory_space<any>>) target_semaphore(%arg2 : memref<!tpu.dma_semaphore, #tpu.memory_space<semaphore_mem>>)
    tpu.wait_dma2 semaphore(%arg2 : memref<!tpu.dma_semaphore, #tpu.memory_space<semaphore_mem>>) src(%arg0 : memref<1x3xf32, #tpu.memory_space<any>>) dst(%arg1 : memref<1x3xf32, #tpu.memory_space<any>>)
    return
  }
}

</mosaic_0001>

<llo_original>
// kernel: _dma_clone.1
$region0: #{_dma_clone.1}
  #allocation0 [shape = 'u32[]', space=smem, size = 0x4, offset = 0x4, fixed_abs, tag = 'smem constant byte address 0x4 - core index']
  #allocation1 [shape = 'u32[72,128]{1,0:T(1,128)}', space=vmem, size = 0x9000, scoped, tag = 'internal scratch']
  #allocation2 [shape = 's32[1]{0}', space=sflag, size = 0x4, scoped, tag = 'scratch operand']
  #allocation3 [shape = 's32[]', space=sflag, size = 0x4, offset = 0, fixed_abs, tag = 'sflag constant byte address 0x0 - dummy sync flag']
  #allocation4 [shape = 'u32[0]{0}', space=smem, size = 0, offset = 0, fixed_abs, tag = 'smem constant byte address 0x0 - null']
  %s0 = inlined_call_operand.hbm [shape: f32[1,3], index: 0, kind: input, shape index: {}]
  %s1 = inlined_call_operand.hbm [shape: f32[1,3], index: 1, kind: output, shape index: {}]
  %s2 = sld [smem:[#allocation0]]
  $region2: #{_dma_clone.1} parent=0
    _
  %s4 = ssub.s32 1, %s2
  %s5 = scalar_select 0, %s4, %s2
  %s7 = sshll.u32 1, 14
  %s8 = sxor.u32 4294967295, %s7
  %s10 = sshll.u32 %s0, 4
  %s11 = int_to_ptr.hbm [resolvable:$true] %s10
  %s12 = sshll.u32 %s1, 4
  %s13 = int_to_ptr.hbm [resolvable:$true] %s12
  %16 = dma.general %s11, 16, %s13, [#allocation2], [#allocation3], [#allocation4], 0, 0
  %s17 = smul.u32 1, 1
  %s18 = sshll.u32 %s17, 4
  %19 = dma.done [#allocation2], %s18
  %20 = vsyncmov [#allocation2]
  %s21 = vpop.sfrf %20
  %p22 = scmp.eq.s32.totalorder %s21, 0
  %p23 = pneg %p22
  %25 = shalt.err (%p23)

</llo_original>
